<compile_context>
chip_gen: v7x
topology: tpu7x:2x2x1
jax: 0.10.0
libtpu: 0.0.40
codegen_flags: <defaults>
</compile_context>

<pallas_src>
import jax
import jax.numpy as jnp
import numpy as np
from jax.experimental import pallas as pl
from jax.experimental.pallas import tpu as pltpu

OUT_PAD = 128  # lane-dense padded output width (state in lanes 0..S-1, reward in lane S)


# ----------------------------- Pallas kernel ------------------------------ #
def _transition_kernel(
    state_ref,   # (TB, S)              f32
    action_ref,  # (TB, 1)              i32
    w1_ref,      # (S+A, 2H)            bf16  heads fused along N
    w2_ref,      # (2H, H + H/2)        bf16  block-diagonal [w2_state | w2_reward]
    w3_ref,      # (H + H/2, OUT_PAD)   bf16  block-diagonal, zero-padded to 128 lanes
    b_ref,       # (8, OUT_PAD)         f32   rows 0/1/2 = b1 / b2 / b3 (zero-padded)
    out_ref,     # (TB, OUT_PAD)        bf16
):
    st = state_ref[...]                      # (TB, S)  f32
    act = action_ref[...]                    # (TB, 1)  i32
    tb, s_dim = st.shape
    k1, n1 = w1_ref.shape                    # S+A, 2H
    a_dim = k1 - s_dim                       # A (= 9)
    n2 = w2_ref.shape[1]                     # H + H/2

    # Action one-hot: VPU compare, then folded into layer 1's K (one MXU pass).
    one_hot = (jax.lax.broadcasted_iota(jnp.int32, (tb, a_dim), 1)
               == act).astype(jnp.float32)                        # (TB, A)
    x = jnp.concatenate([st, one_hot], axis=1)                    # (TB, S+A) f32

    b1 = b_ref[0:1, :n1]                     # (1, 2H)
    b2 = b_ref[1:2, :n2]                     # (1, H+H/2)
    b3 = b_ref[2:3, :]                       # (1, OUT_PAD)

    # ---- layer 1 (both heads fused along N)
    h = jnp.dot(x.astype(jnp.bfloat16), w1_ref[...],
                preferred_element_type=jnp.float32) + b1
    h = jnp.maximum(h, 0.0)                  # (TB, 2H) f32

    # ---- layer 2 (block-diagonal fused)
    h = jnp.dot(h.astype(jnp.bfloat16), w2_ref[...],
                preferred_element_type=jnp.float32) + b2
    h = jnp.maximum(h, 0.0)                  # (TB, H + H/2) f32

    # ---- layer 3 (block-diagonal fused, padded to 128 lanes) -> lane-dense bf16 store
    y = jnp.dot(h.astype(jnp.bfloat16), w3_ref[...],
                preferred_element_type=jnp.float32) + b3
    out_ref[...] = y.astype(out_ref.dtype)


# ------------------------------ JAX wrapper -------------------------------- #
def _choose_batch_tile(B):
    """tb multiple of 16, >=2 (ideally ~4) grid steps when B >= 32, capped at 256."""
    if B < 32:
        return B                              # tiny batch: single grid step
    tb = ((B // 4) // 16) * 16
    return int(np.clip(tb, 16, 256))


def transition_model_forward(state, action, kp):
    """state: (B, state_dim) f32, action: (B, 1) i32 in [0, 9)."""
    B, S = state.shape
    tb = _choose_batch_tile(B)
    n_blocks = pl.cdiv(B, tb)
    Bp = n_blocks * tb
    if Bp != B:                               # keep every output store full-width
        state = jnp.pad(state, ((0, Bp - B), (0, 0)))
        action = jnp.pad(action, ((0, Bp - B), (0, 0)))   # pads with action 0 (valid)

    # Deeper buffering only pays once the grid actually has multiple steps.
    pipe = dict(pipeline_mode=pl.Buffered(3)) if n_blocks > 1 else {}

    in_specs = [
        pl.BlockSpec((tb, S), lambda i: (i, 0), **pipe),        # state
        pl.BlockSpec((tb, 1), lambda i: (i, 0), **pipe),        # action
        pl.BlockSpec(kp["w1"].shape, lambda i: (0, 0)),         # weights stay resident
        pl.BlockSpec(kp["w2"].shape, lambda i: (0, 0)),
        pl.BlockSpec(kp["w3"].shape, lambda i: (0, 0)),
        pl.BlockSpec(kp["bias"].shape, lambda i: (0, 0)),
    ]
    out_specs = pl.BlockSpec((tb, OUT_PAD), lambda i: (i, 0), **pipe)

    out = pl.pallas_call(
        _transition_kernel,
        grid=(n_blocks,),
        in_specs=in_specs,
        out_specs=out_specs,
        out_shape=jax.ShapeDtypeStruct((Bp, OUT_PAD), jnp.bfloat16),
        compiler_params=pltpu.CompilerParams(
            dimension_semantics=("parallel",)),
    )(state, action, kp["w1"], kp["w2"], kp["w3"], kp["bias"])

    # TODO(synk): if this runs per-env-step in an RL loop, batch many steps/envs
    # into one call — per-call dispatch dominates at B=8.
    next_state_pred = out[:B, :S].astype(jnp.float32)
    reward_pred = out[:B, S:S + 1].astype(jnp.float32)
    return next_state_pred, reward_pred


# ------------------------- deterministic parameters ------------------------ #
def init_ref_params(key, state_dim, action_dim, hidden_dim):
    """nn.Linear-style init (U[-1/sqrt(fan_in), 1/sqrt(fan_in)]), weights (in, out)."""
    input_dim = state_dim + action_dim
    h_half = hidden_dim // 2

    def linear(k, fan_in, fan_out):
        kw, kb = jax.random.split(k)
        bound = 1.0 / np.sqrt(fan_in)
        w = jax.random.uniform(kw, (fan_in, fan_out), jnp.float32, -bound, bound)
        b = jax.random.uniform(kb, (1, fan_out), jnp.float32, -bound, bound)
        return w, b

    ks = jax.random.split(key, 6)
    w1s, b1s = linear(ks[0], input_dim, hidden_dim)
    w2s, b2s = linear(ks[1], hidden_dim, hidden_dim)
    w3s, b3s = linear(ks[2], hidden_dim, state_dim)
    w1r, b1r = linear(ks[3], input_dim, hidden_dim)
    w2r, b2r = linear(ks[4], hidden_dim, h_half)
    w3r, b3r = linear(ks[5], h_half, 1)

    return {"w1s": w1s, "b1s": b1s, "w2s": w2s, "b2s": b2s, "w3s": w3s, "b3s": b3s,
            "w1r": w1r, "b1r": b1r, "w2r": w2r, "b2r": b2r, "w3r": w3r, "b3r": b3r}


def pack_kernel_params(rp, state_dim, action_dim, hidden_dim):
    """Pack both heads into head-fused (N-concat / block-diagonal) weights + one bias slab."""
    H = hidden_dim
    Hh = H // 2
    assert 2 * H <= OUT_PAD and H + Hh <= OUT_PAD and state_dim + 1 <= OUT_PAD

    # Layer 1: concat heads along N -> (S+A, 2H) bf16 (one MXU pass, K = S+A).
    w1 = jnp.concatenate([rp["w1s"], rp["w1r"]], axis=1).astype(jnp.bfloat16)

    # Layer 2: block-diagonal (2H, H + H/2) bf16.
    w2 = jnp.zeros((2 * H, H + Hh), jnp.float32)
    w2 = w2.at[:H, :H].set(rp["w2s"]).at[H:, H:].set(rp["w2r"]).astype(jnp.bfloat16)

    # Layer 3: block-diagonal, padded to OUT_PAD lanes (state 0..S-1, reward lane S).
    w3 = jnp.zeros((H + Hh, OUT_PAD), jnp.float32)
    w3 = w3.at[:H, :state_dim].set(rp["w3s"])
    w3 = w3.at[H:, state_dim:state_dim + 1].set(rp["w3r"])
    w3 = w3.astype(jnp.bfloat16)

    # All biases in ONE (8, OUT_PAD) f32 slab: rows 0/1/2 = b1/b2/b3, zero-padded.
    bias = jnp.zeros((8, OUT_PAD), jnp.float32)
    bias = bias.at[0, :2 * H].set(jnp.concatenate([rp["b1s"], rp["b1r"]], axis=1)[0])
    bias = bias.at[1, :H + Hh].set(jnp.concatenate([rp["b2s"], rp["b2r"]], axis=1)[0])
    bias = bias.at[2, :state_dim].set(rp["b3s"][0])
    bias = bias.at[2, state_dim].set(rp["b3r"][0, 0])

    return {"w1": w1, "w2": w2, "w3": w3, "bias": bias}


# ------------------------------ reference (JAX) ----------------------------- #
def reference_forward(state, action, rp, action_dim):
    one_hot = jax.nn.one_hot(action[:, 0], action_dim, dtype=jnp.float32)
    x = jnp.concatenate([state, one_hot], axis=1)
    h = jax.nn.relu(x @ rp["w1s"] + rp["b1s"])
    h = jax.nn.relu(h @ rp["w2s"] + rp["b2s"])
    ns = h @ rp["w3s"] + rp["b3s"]
    g = jax.nn.relu(x @ rp["w1r"] + rp["b1r"])
    g = jax.nn.relu(g @ rp["w2r"] + rp["b2r"])
    r = g @ rp["w3r"] + rp["b3r"]
    return ns, r


if __name__ == "__main__":
    B, STATE_DIM, ACTION_DIM, HIDDEN_DIM = 8, 16, 9, 64

    key = jax.random.PRNGKey(0)
    k_params, k_state, k_action = jax.random.split(key, 3)

    ref_params = init_ref_params(k_params, STATE_DIM, ACTION_DIM, HIDDEN_DIM)
    kernel_params = pack_kernel_params(ref_params, STATE_DIM, ACTION_DIM, HIDDEN_DIM)

    state = jax.random.normal(k_state, (B, STATE_DIM), jnp.float32)
    action = jax.random.randint(k_action, (B, 1), 0, ACTION_DIM, jnp.int32)

    next_state_pred, reward_pred = jax.block_until_ready(
        transition_model_forward(state, action, kernel_params))

    ns_ref, r_ref = reference_forward(state, action, ref_params, ACTION_DIM)
    assert next_state_pred.shape == (B, STATE_DIM)
    assert reward_pred.shape == (B, 1)
    # Tolerance relaxed vs pure-f32: MXU operands and the output slab are bf16
    # (accumulation stays f32), per the v5e/v6e/v7x perf recommendations.
    np.testing.assert_allclose(np.asarray(next_state_pred), np.asarray(ns_ref),
                               rtol=5e-2, atol=5e-2)
    np.testing.assert_allclose(np.asarray(reward_pred), np.asarray(r_ref),
                               rtol=5e-2, atol=5e-2)

    print("KERNEL_OK")
</pallas_src>

<mosaic_0001>
module attributes {stable_mosaic.version = 11 : i64} {
  func.func @_transition_kernel(%arg0: i32, %arg1: memref<8x16xf32, #tpu.memory_space<vmem>>, %arg2: memref<8x1xi32, #tpu.memory_space<vmem>>, %arg3: memref<25x128xbf16, #tpu.memory_space<vmem>>, %arg4: memref<128x96xbf16, #tpu.memory_space<vmem>>, %arg5: memref<96x128xbf16, #tpu.memory_space<vmem>>, %arg6: memref<8x128xf32, #tpu.memory_space<vmem>>, %arg7: memref<8x128xbf16, #tpu.memory_space<vmem>>) attributes {dimension_semantics = [#tpu.dimension_semantics<parallel>], iteration_bounds = array<i64: 1>, scalar_prefetch = 0 : i64, scratch_operands = 0 : i64, tpu.core_type = #tpu.core_type<tc>, window_params = [{transform_indices = @transform_0, window_bounds = array<i64: 8, 16>}, {transform_indices = @transform_1, window_bounds = array<i64: 8, 1>}, {pipeline_mode = #tpu.pipeline_mode<synchronous>, transform_indices = @transform_2, window_bounds = array<i64: 25, 128>}, {pipeline_mode = #tpu.pipeline_mode<synchronous>, transform_indices = @transform_3, window_bounds = array<i64: 128, 96>}, {pipeline_mode = #tpu.pipeline_mode<synchronous>, transform_indices = @transform_4, window_bounds = array<i64: 96, 128>}, {pipeline_mode = #tpu.pipeline_mode<synchronous>, transform_indices = @transform_5, window_bounds = array<i64: 8, 128>}, {transform_indices = @transform_6, window_bounds = array<i64: 8, 128>}]} {
    %c0 = arith.constant 0 : index
    %c0_0 = arith.constant 0 : index
    %0 = vector.load %arg1[%c0, %c0_0] : memref<8x16xf32, #tpu.memory_space<vmem>>, vector<8x16xf32>
    %c0_1 = arith.constant 0 : index
    %c0_2 = arith.constant 0 : index
    %1 = vector.load %arg2[%c0_1, %c0_2] : memref<8x1xi32, #tpu.memory_space<vmem>>, vector<8x1xi32>
    %2 = tpu.iota {dimensions = array<i32: 1>} : vector<8x9xi32>
    %3 = vector.broadcast %1 : vector<8x1xi32> to vector<8x9xi32>
    %4 = arith.cmpi eq, %2, %3 : vector<8x9xi32>
    %5 = arith.extui %4 : vector<8x9xi1> to vector<8x9xi32>
    %6 = arith.sitofp %5 : vector<8x9xi32> to vector<8x9xf32>
    %7 = tpu.concatenate %0, %6 in 1 : vector<8x16xf32>, vector<8x9xf32> -> vector<8x25xf32>
    %c0_3 = arith.constant 0 : index
    %c0_4 = arith.constant 0 : index
    %8 = vector.load %arg6[%c0_3, %c0_4] : memref<8x128xf32, #tpu.memory_space<vmem>>, vector<1x128xf32>
    %c1 = arith.constant 1 : index
    %c0_5 = arith.constant 0 : index
    %9 = vector.load %arg6[%c1, %c0_5] : memref<8x128xf32, #tpu.memory_space<vmem>>, vector<1x96xf32>
    %c2 = arith.constant 2 : index
    %c0_6 = arith.constant 0 : index
    %10 = vector.load %arg6[%c2, %c0_6] : memref<8x128xf32, #tpu.memory_space<vmem>>, vector<1x128xf32>
    %11 = arith.truncf %7 : vector<8x25xf32> to vector<8x25xbf16>
    %c0_7 = arith.constant 0 : index
    %c0_8 = arith.constant 0 : index
    %12 = vector.load %arg3[%c0_7, %c0_8] : memref<25x128xbf16, #tpu.memory_space<vmem>>, vector<25x128xbf16>
    %cst = arith.constant dense<0.000000e+00> : vector<8x128xf32>
    %13 = tpu.matmul %11, %12, %cst {dimension_numbers = #tpu.dot_dimension_numbers<[1], [0], [0], [1], [0, 0, 1, 1], [], []>} : vector<8x25xbf16>, vector<25x128xbf16>, vector<8x128xf32> -> vector<8x128xf32>
    %14 = vector.broadcast %8 : vector<1x128xf32> to vector<8x128xf32>
    %15 = arith.addf %13, %14 : vector<8x128xf32>
    %cst_9 = arith.constant 0.000000e+00 : f32
    %16 = vector.broadcast %cst_9 : f32 to vector<8x128xf32>
    %17 = arith.maximumf %15, %16 : vector<8x128xf32>
    %18 = arith.truncf %17 : vector<8x128xf32> to vector<8x128xbf16>
    %c0_10 = arith.constant 0 : index
    %c0_11 = arith.constant 0 : index
    %19 = vector.load %arg4[%c0_10, %c0_11] : memref<128x96xbf16, #tpu.memory_space<vmem>>, vector<128x96xbf16>
    %cst_12 = arith.constant dense<0.000000e+00> : vector<8x96xf32>
    %20 = tpu.matmul %18, %19, %cst_12 {dimension_numbers = #tpu.dot_dimension_numbers<[1], [0], [0], [1], [0, 0, 1, 1], [], []>} : vector<8x128xbf16>, vector<128x96xbf16>, vector<8x96xf32> -> vector<8x96xf32>
    %21 = vector.broadcast %9 : vector<1x96xf32> to vector<8x96xf32>
    %22 = arith.addf %20, %21 : vector<8x96xf32>
    %cst_13 = arith.constant 0.000000e+00 : f32
    %23 = vector.broadcast %cst_13 : f32 to vector<8x96xf32>
    %24 = arith.maximumf %22, %23 : vector<8x96xf32>
    %25 = arith.truncf %24 : vector<8x96xf32> to vector<8x96xbf16>
    %c0_14 = arith.constant 0 : index
    %c0_15 = arith.constant 0 : index
    %26 = vector.load %arg5[%c0_14, %c0_15] : memref<96x128xbf16, #tpu.memory_space<vmem>>, vector<96x128xbf16>
    %cst_16 = arith.constant dense<0.000000e+00> : vector<8x128xf32>
    %27 = tpu.matmul %25, %26, %cst_16 {dimension_numbers = #tpu.dot_dimension_numbers<[1], [0], [0], [1], [0, 0, 1, 1], [], []>} : vector<8x96xbf16>, vector<96x128xbf16>, vector<8x128xf32> -> vector<8x128xf32>
    %28 = vector.broadcast %10 : vector<1x128xf32> to vector<8x128xf32>
    %29 = arith.addf %27, %28 : vector<8x128xf32>
    %30 = arith.truncf %29 : vector<8x128xf32> to vector<8x128xbf16>
    %c0_17 = arith.constant 0 : index
    %c0_18 = arith.constant 0 : index
    %31 = vector.load %arg7[%c0_17, %c0_18] : memref<8x128xbf16, #tpu.memory_space<vmem>>, vector<8x128xbf16>
    tpu.vector_store %arg7[%c0_17, %c0_18], %30 {strides = array<i32>} : memref<8x128xbf16, #tpu.memory_space<vmem>>, vector<8x128xbf16>,
    return
  }
  func.func @transform_0(%arg0: i32) -> (i32, i32) {
    %c0_i32 = arith.constant 0 : i32
    %c0_i32_0 = arith.constant 0 : i32
    return %arg0, %c0_i32 : i32, i32
  }
  func.func @transform_1(%arg0: i32) -> (i32, i32) {
    %c0_i32 = arith.constant 0 : i32
    %c0_i32_0 = arith.constant 0 : i32
    return %arg0, %c0_i32 : i32, i32
  }
  func.func @transform_2(%arg0: i32) -> (i32, i32) {
    %c0_i32 = arith.constant 0 : i32
    %c0_i32_0 = arith.constant 0 : i32
    %c0_i32_1 = arith.constant 0 : i32
    return %c0_i32, %c0_i32_0 : i32, i32
  }
  func.func @transform_3(%arg0: i32) -> (i32, i32) {
    %c0_i32 = arith.constant 0 : i32
    %c0_i32_0 = arith.constant 0 : i32
    %c0_i32_1 = arith.constant 0 : i32
    return %c0_i32, %c0_i32_0 : i32, i32
  }
  func.func @transform_4(%arg0: i32) -> (i32, i32) {
    %c0_i32 = arith.constant 0 : i32
    %c0_i32_0 = arith.constant 0 : i32
    %c0_i32_1 = arith.constant 0 : i32
    return %c0_i32, %c0_i32_0 : i32, i32
  }
  func.func @transform_5(%arg0: i32) -> (i32, i32) {
    %c0_i32 = arith.constant 0 : i32
    %c0_i32_0 = arith.constant 0 : i32
    %c0_i32_1 = arith.constant 0 : i32
    return %c0_i32, %c0_i32_0 : i32, i32
  }
  func.func @transform_6(%arg0: i32) -> (i32, i32) {
    %c0_i32 = arith.constant 0 : i32
    %c0_i32_0 = arith.constant 0 : i32
    return %arg0, %c0_i32 : i32, i32
  }
}

</mosaic_0001>

<llo_original>
// kernel: tpu_custom_call.1
$region0: #{tpu_custom_call.1}
  #allocation0 [shape = 'u32[]', space=smem, size = 0x4, offset = 0x4, fixed_abs, tag = 'smem constant byte address 0x4 - core index']
  #allocation1 [shape = 'u32[144,128]{1,0:T(1,128)}', space=vmem, size = 0x12000, scoped, tag = 'internal scratch']
  %s0 = inlined_call_operand.vmem [shape: f32[8,16], index: 0, kind: input, shape index: {}]
  %s1 = inlined_call_operand.vmem [shape: s32[8,1], index: 1, kind: input, shape index: {}]
  %s2 = inlined_call_operand.vmem [shape: bf16[25,128], index: 2, kind: input, shape index: {}]
  %s3 = inlined_call_operand.vmem [shape: bf16[128,96], index: 3, kind: input, shape index: {}]
  %s4 = inlined_call_operand.vmem [shape: bf16[96,128], index: 4, kind: input, shape index: {}]
  %s5 = inlined_call_operand.vmem [shape: f32[8,128], index: 5, kind: input, shape index: {}]
  %s6 = inlined_call_operand.hbm [shape: bf16[8,128], index: 6, kind: output, shape index: {}]
  %s7 = sld [smem:[#allocation0]]
  $region34: #{tpu_custom_call.1} parent=0
    _
  %s9 = ssub.s32 1, %s7
  %s10 = scalar_select 0, %s9, %s7
  $region1: #{tpu_custom_call.1} parent=0
    #allocation2 [shape = 'u8[2048]{0}', space=vmem, size = 0x800, scoped, tag = 'output window, operand 0, single buffered']
    #allocation3 [shape = 's32[1]{0}', space=sflag, size = 0x4, scoped, tag = 'scoped memory for tpu_custom_call.1']
    %11 = vsyncpa [#allocation3], 0
    // Predicated region
    $region2: #{tpu_custom_call.1} parent=1 // pred_check
      _
    $region3: #{tpu_custom_call.1} parent=1 // pred_check_branch
      %13 = sbr.rel (0) target = $region5
    $region4: #{tpu_custom_call.1} parent=1 // pred_region
      _
    $region5: #{tpu_custom_call.1} parent=1 // pred_fallthru
      _
    // Predicated region
    $region6: #{tpu_custom_call.1} parent=1 // pred_check
      _
    $region7: #{tpu_custom_call.1} parent=1 // pred_check_branch
      %15 = sbr.rel (0) target = $region9
    $region8: #{tpu_custom_call.1} parent=1 // pred_region
      _
    $region9: #{tpu_custom_call.1} parent=1 // pred_fallthru
      _
    // Predicated region
    $region10: #{tpu_custom_call.1} parent=1 // pred_check
      _
    $region11: #{tpu_custom_call.1} parent=1 // pred_check_branch
      %17 = sbr.rel (0) target = $region13
    $region12: #{tpu_custom_call.1} parent=1 // pred_region
      _
    $region13: #{tpu_custom_call.1} parent=1 // pred_fallthru
      _
    // Predicated region
    $region14: #{tpu_custom_call.1} parent=1 // pred_check
      _
    $region15: #{tpu_custom_call.1} parent=1 // pred_check_branch
      %19 = sbr.rel (0) target = $region17
    $region16: #{tpu_custom_call.1} parent=1 // pred_region
      _
    $region17: #{tpu_custom_call.1} parent=1 // pred_fallthru
      _
    // Predicated region
    $region18: #{tpu_custom_call.1} parent=1 // pred_check
      _
    $region19: #{tpu_custom_call.1} parent=1 // pred_check_branch
      %21 = sbr.rel (0) target = $region21
    $region20: #{tpu_custom_call.1} parent=1 // pred_region
      _
    $region21: #{tpu_custom_call.1} parent=1 // pred_fallthru
      _
    // Predicated region
    $region22: #{tpu_custom_call.1} parent=1 // pred_check
      _
    $region23: #{tpu_custom_call.1} parent=1 // pred_check_branch
      %23 = sbr.rel (0) target = $region25
    $region24: #{tpu_custom_call.1} parent=1 // pred_region
      _
    $region25: #{tpu_custom_call.1} parent=1 // pred_fallthru
      _
    %v25 = vld [vmem:[%s0] sm:$0xff]
    %v26 = vld [vmem:[%s1] sm:$0xff]
    %v27 = vlaneseq
    %v28 = vand.u32 %v27, 127
    %29 = vset.pattern.permute.xlu0 0
    %30 = vperm.xlu0 %29, %v26
    %v31 = vpop.permute.xlu0 %30
    %vm32 = vcmp.eq.s32.totalorder %v28, %v31
    %v33 = vsel %vm32, 1, 0
    %v34 = vcvt.s32.f32 %v33
    %36 = vrot.lane.b32.xlu0 %v34, 16
    %v37 = vpop.permute.xlu0 %36
    %vm39 = vcmask 130048
    %v40 = vsel %vm39, %v25, %v37
    %v41 = vld [vmem:[%s5] sm:$0x1]
    %v42 = vld [vmem:[%s5 + $0x1] sm:$0x1]
    %v43 = vld [vmem:[%s5 + $0x2] sm:$0x1]
    %v44 = vpack.c.bf16 %v40, %v40
    %v45 = vld [vmem:[%s2] sm:$0xf]
    %v46 = vld [vmem:[%s2 + $0x4] sm:$0xf]
    %v47 = vld [vmem:[%s2 + $0x8] sm:$0xf]
    %v48 = vld [vmem:[%s2 + $0xc] sm:$0x1]
    %v49 = vlaneseq
    %v50 = vshrl.u32 %v49, 7
    %v51 = vsub.s32 0, %v50
    %v52 = vrot.slane %v41, %v51
    %v57 = vunpack.c.l.b16 %v45
    %v58 = vunpack.c.l.b16 %v46
    %v59 = vunpack.c.l.b16 %v47
    %v60 = vunpack.c.l.b16 %v48
    %v61 = vpack.c.b16 %v58, %v57
    %v62 = vpack.c.b16 %v60, %v59
    %vm64 = vcmask 203776
    %v66 = vsel %vm64, %v44, 0
    %vm68 = vcmask 1043456
    %vm69 = vcmask 1044480
    %v70 = vsel %vm68, 4294967295, 65535
    %v71 = vsel %vm69, %v70, 0
    %v73 = vand.u32 %v62, %v71
    %75 = vmatprep.subr.bf16.mxu0 0
    %76 = vmatpush1.bf16.msra.mxu0 %v61
    %77 = vmatprep.subr.bf16.mxu0 0
    %78 = vmatpush1.bf16.msra.mxu0 %v73
    %79 = vmatprep.subr.bf16.mxu0 0
    %80 = vmatpush1.bf16.msra.mxu0 0
    %81 = vmatprep.subr.bf16.mxu0 0
    %82 = vmatpush1.bf16.msra.mxu0 0
    %83 = vmatprep.subr.bf16.mxu0 0
    %84 = vmatpush1.bf16.msra.mxu0 0
    %85 = vmatprep.subr.bf16.mxu0 0
    %86 = vmatpush1.bf16.msra.mxu0 0
    %87 = vmatprep.subr.bf16.mxu0 0
    %88 = vmatpush1.bf16.msra.mxu0 0
    %89 = vmatprep.subr.bf16.mxu0 0
    %90 = vmatpush1.bf16.msra.mxu0 0
    %91 = vmatprep.subr.bf16.mxu0 0
    %92 = vmatpush1.bf16.msra.mxu0 0
    %93 = vmatprep.subr.bf16.mxu0 0
    %94 = vmatpush1.bf16.msra.mxu0 0
    %95 = vmatprep.subr.bf16.mxu0 0
    %96 = vmatpush1.bf16.msra.mxu0 0
    %97 = vmatprep.subr.bf16.mxu0 0
    %98 = vmatpush1.bf16.msra.mxu0 0
    %99 = vmatprep.subr.bf16.mxu0 0
    %100 = vmatpush1.bf16.msra.mxu0 0
    %101 = vmatprep.subr.bf16.mxu0 0
    %102 = vmatpush1.bf16.msra.mxu0 0
    %103 = vmatprep.subr.bf16.mxu0 0
    %104 = vmatpush1.bf16.msra.mxu0 0
    %105 = vmatprep.subr.bf16.mxu0 0
    %106 = vmatpush1.bf16.msra.mxu0 0
    %107 = vmatprep.mubr.bf16.mxu0 0
    %108 = vmatmul.mubr.bf16.gmra.mrb[0].mxu0 %v66
    %v109 = vpop.f32.mrb[0].mxu0
    %v110 = vadd.f32 %v52, %v109
    %v111 = vpop.f32.mrb[0].mxu0
    %v112 = vpop.f32.mrb[0].mxu0
    %v113 = vpop.f32.mrb[0].mxu0
    %114 = vdwg.mxu0
    %v115 = vmax.f32 %v110, 0.0
    %v116 = vpack.c.bf16 %v115, %v115
    %v117 = vld [vmem:[%s3] sm:$0xf]
    %v118 = vld [vmem:[%s3 + $0x4] sm:$0xf]
    %v119 = vld [vmem:[%s3 + $0x8] sm:$0xf]
    %v120 = vld [vmem:[%s3 + $0xc] sm:$0xf]
    %v121 = vld [vmem:[%s3 + $0x10] sm:$0xf]
    %v122 = vld [vmem:[%s3 + $0x14] sm:$0xf]
    %v123 = vld [vmem:[%s3 + $0x18] sm:$0xf]
    %v124 = vld [vmem:[%s3 + $0x1c] sm:$0xf]
    %v125 = vld [vmem:[%s3 + $0x20] sm:$0xf]
    %v126 = vld [vmem:[%s3 + $0x24] sm:$0xf]
    %v127 = vld [vmem:[%s3 + $0x28] sm:$0xf]
    %v128 = vld [vmem:[%s3 + $0x2c] sm:$0xf]
    %v129 = vld [vmem:[%s3 + $0x30] sm:$0xf]
    %v130 = vld [vmem:[%s3 + $0x34] sm:$0xf]
    %v131 = vld [vmem:[%s3 + $0x38] sm:$0xf]
    %v132 = vld [vmem:[%s3 + $0x3c] sm:$0xf]
    %v133 = vlaneseq
    %v134 = vshrl.u32 %v133, 7
    %v135 = vsub.s32 0, %v134
    %v136 = vrot.slane %v42, %v135
    %v153 = vunpack.c.l.b16 %v117
    %v154 = vunpack.c.l.b16 %v118
    %v155 = vunpack.c.l.b16 %v119
    %v156 = vunpack.c.l.b16 %v120
    %v157 = vunpack.c.l.b16 %v121
    %v158 = vunpack.c.l.b16 %v122
    %v159 = vunpack.c.l.b16 %v123
    %v160 = vunpack.c.l.b16 %v124
    %v161 = vunpack.c.l.b16 %v125
    %v162 = vunpack.c.l.b16 %v126
    %v163 = vunpack.c.l.b16 %v127
    %v164 = vunpack.c.l.b16 %v128
    %v165 = vunpack.c.l.b16 %v129
    %v166 = vunpack.c.l.b16 %v130
    %v167 = vunpack.c.l.b16 %v131
    %v168 = vunpack.c.l.b16 %v132
    %v169 = vpack.c.b16 %v154, %v153
    %v170 = vpack.c.b16 %v156, %v155
    %v171 = vpack.c.b16 %v158, %v157
    %v172 = vpack.c.b16 %v160, %v159
    %v173 = vpack.c.b16 %v162, %v161
    %v174 = vpack.c.b16 %v164, %v163
    %v175 = vpack.c.b16 %v166, %v165
    %v176 = vpack.c.b16 %v168, %v167
    %185 = vmatprep.subr.bf16.mxu0 0
    %186 = vmatpush1.bf16.msra.mxu0 %v169
    %187 = vmatprep.subr.bf16.mxu0 0
    %188 = vmatpush1.bf16.msra.mxu0 %v170
    %189 = vmatprep.subr.bf16.mxu0 0
    %190 = vmatpush1.bf16.msra.mxu0 %v171
    %191 = vmatprep.subr.bf16.mxu0 0
    %192 = vmatpush1.bf16.msra.mxu0 %v172
    %193 = vmatprep.subr.bf16.mxu0 0
    %194 = vmatpush1.bf16.msra.mxu0 %v173
    %195 = vmatprep.subr.bf16.mxu0 0
    %196 = vmatpush1.bf16.msra.mxu0 %v174
    %197 = vmatprep.subr.bf16.mxu0 0
    %198 = vmatpush1.bf16.msra.mxu0 %v175
    %199 = vmatprep.subr.bf16.mxu0 0
    %200 = vmatpush1.bf16.msra.mxu0 %v176
    %201 = vmatprep.subr.bf16.mxu0 0
    %202 = vmatpush1.bf16.msra.mxu0 0
    %203 = vmatprep.subr.bf16.mxu0 0
    %204 = vmatpush1.bf16.msra.mxu0 0
    %205 = vmatprep.subr.bf16.mxu0 0
    %206 = vmatpush1.bf16.msra.mxu0 0
    %207 = vmatprep.subr.bf16.mxu0 0
    %208 = vmatpush1.bf16.msra.mxu0 0
    %209 = vmatprep.subr.bf16.mxu0 0
    %210 = vmatpush1.bf16.msra.mxu0 0
    %211 = vmatprep.subr.bf16.mxu0 0
    %212 = vmatpush1.bf16.msra.mxu0 0
    %213 = vmatprep.subr.bf16.mxu0 0
    %214 = vmatpush1.bf16.msra.mxu0 0
    %215 = vmatprep.subr.bf16.mxu0 0
    %216 = vmatpush1.bf16.msra.mxu0 0
    %217 = vmatprep.mubr.bf16.mxu0 0
    %218 = vmatmul.mubr.bf16.gmra.mrb[0].mxu0 %v116
    %v219 = vpop.f32.mrb[0].mxu0
    %v220 = vadd.f32 %v136, %v219
    %v221 = vpop.f32.mrb[0].mxu0
    %v222 = vpop.f32.mrb[0].mxu0
    %v223 = vpop.f32.mrb[0].mxu0
    %224 = vdwg.mxu0
    %v225 = vmax.f32 %v220, 0.0
    %v226 = vpack.c.bf16 %v225, %v225
    %v227 = vld [vmem:[%s4] sm:$0xf]
    %v228 = vld [vmem:[%s4 + $0x4] sm:$0xf]
    %v229 = vld [vmem:[%s4 + $0x8] sm:$0xf]
    %v230 = vld [vmem:[%s4 + $0xc] sm:$0xf]
    %v231 = vld [vmem:[%s4 + $0x10] sm:$0xf]
    %v232 = vld [vmem:[%s4 + $0x14] sm:$0xf]
    %v233 = vld [vmem:[%s4 + $0x18] sm:$0xf]
    %v234 = vld [vmem:[%s4 + $0x1c] sm:$0xf]
    %v235 = vld [vmem:[%s4 + $0x20] sm:$0xf]
    %v236 = vld [vmem:[%s4 + $0x24] sm:$0xf]
    %v237 = vld [vmem:[%s4 + $0x28] sm:$0xf]
    %v238 = vld [vmem:[%s4 + $0x2c] sm:$0xf]
    %v239 = vlaneseq
    %v240 = vshrl.u32 %v239, 7
    %v241 = vsub.s32 0, %v240
    %v242 = vrot.slane %v43, %v241
    %v255 = vunpack.c.l.b16 %v227
    %v256 = vunpack.c.l.b16 %v228
    %v257 = vunpack.c.l.b16 %v229
    %v258 = vunpack.c.l.b16 %v230
    %v259 = vunpack.c.l.b16 %v231
    %v260 = vunpack.c.l.b16 %v232
    %v261 = vunpack.c.l.b16 %v233
    %v262 = vunpack.c.l.b16 %v234
    %v263 = vunpack.c.l.b16 %v235
    %v264 = vunpack.c.l.b16 %v236
    %v265 = vunpack.c.l.b16 %v237
    %v266 = vunpack.c.l.b16 %v238
    %v267 = vpack.c.b16 %v256, %v255
    %v268 = vpack.c.b16 %v258, %v257
    %v269 = vpack.c.b16 %v260, %v259
    %v270 = vpack.c.b16 %v262, %v261
    %v271 = vpack.c.b16 %v264, %v263
    %v272 = vpack.c.b16 %v266, %v265
    %vm279 = vcmask 785408
    %v281 = vsel %vm279, %v226, 0
    %283 = vmatprep.subr.bf16.mxu0 0
    %284 = vmatpush1.bf16.msra.mxu0 %v267
    %285 = vmatprep.subr.bf16.mxu0 0
    %286 = vmatpush1.bf16.msra.mxu0 %v268
    %287 = vmatprep.subr.bf16.mxu0 0
    %288 = vmatpush1.bf16.msra.mxu0 %v269
    %289 = vmatprep.subr.bf16.mxu0 0
    %290 = vmatpush1.bf16.msra.mxu0 %v270
    %291 = vmatprep.subr.bf16.mxu0 0
    %292 = vmatpush1.bf16.msra.mxu0 %v271
    %293 = vmatprep.subr.bf16.mxu0 0
    %294 = vmatpush1.bf16.msra.mxu0 %v272
    %295 = vmatprep.subr.bf16.mxu0 0
    %296 = vmatpush1.bf16.msra.mxu0 0
    %297 = vmatprep.subr.bf16.mxu0 0
    %298 = vmatpush1.bf16.msra.mxu0 0
    %299 = vmatprep.subr.bf16.mxu0 0
    %300 = vmatpush1.bf16.msra.mxu0 0
    %301 = vmatprep.subr.bf16.mxu0 0
    %302 = vmatpush1.bf16.msra.mxu0 0
    %303 = vmatprep.subr.bf16.mxu0 0
    %304 = vmatpush1.bf16.msra.mxu0 0
    %305 = vmatprep.subr.bf16.mxu0 0
    %306 = vmatpush1.bf16.msra.mxu0 0
    %307 = vmatprep.subr.bf16.mxu0 0
    %308 = vmatpush1.bf16.msra.mxu0 0
    %309 = vmatprep.subr.bf16.mxu0 0
    %310 = vmatpush1.bf16.msra.mxu0 0
    %311 = vmatprep.subr.bf16.mxu0 0
    %312 = vmatpush1.bf16.msra.mxu0 0
    %313 = vmatprep.subr.bf16.mxu0 0
    %314 = vmatpush1.bf16.msra.mxu0 0
    %315 = vmatprep.mubr.bf16.mxu0 0
    %316 = vmatmul.mubr.bf16.gmra.mrb[0].mxu0 %v281
    %v317 = vpop.f32.mrb[0].mxu0
    %v318 = vadd.f32 %v242, %v317
    %v319 = vpop.f32.mrb[0].mxu0
    %v320 = vpop.f32.mrb[0].mxu0
    %v321 = vpop.f32.mrb[0].mxu0
    %322 = vdwg.mxu0
    %v323 = vpack.c.bf16 %v318, %v318
    %324 = vst [vmem:[#allocation2] sm:$0xf] %v323
    // Predicated region
    $region26: #{tpu_custom_call.1} parent=1 // pred_check
      _
    $region27: #{tpu_custom_call.1} parent=1 // pred_check_branch
      %326 = sbr.rel (0) target = $region29
    $region28: #{tpu_custom_call.1} parent=1 // pred_region
      %s328 = ssub.s32 64, 64
      %329 = vsyncadd [#allocation3], %s328
      %s331 = sshll.u32 [#allocation2], 4
      %s332 = int_to_ptr.vmem [resolvable:$true] %s331
      %334 = dma.vmem_to_hbm [thread:$0]  %s332, 64, %s6, [#allocation3]
    $region29: #{tpu_custom_call.1} parent=1 // pred_fallthru
      _
    // Predicated region
    $region30: #{tpu_custom_call.1} parent=1 // pred_check
      _
    $region31: #{tpu_custom_call.1} parent=1 // pred_check_branch
      %336 = sbr.rel (0) target = $region33
    $region32: #{tpu_custom_call.1} parent=1 // pred_region
      %337 = dma.done [#allocation3], 64
    $region33: #{tpu_custom_call.1} parent=1 // pred_fallthru
      _
    %338 = vsyncpa [#allocation3], 1

</llo_original>
